<compile_context>
chip_gen: v5e
topology: v5e:2x2
jax: 0.10.0
libtpu: 0.0.40
codegen_flags: <defaults>
</compile_context>

<pallas_src>
from functools import partial

import jax
import jax.numpy as jnp
from jax.experimental import pallas as pl
from jax.experimental.pallas import tpu as pltpu


# ----------------------------------------------------------------------------
# Kernel 1: fused 2-layer Prenet
# ----------------------------------------------------------------------------
def _prenet_fused_kernel(x_ref, w1_ref, w2_ref, m1_ref, m2_ref, o_ref):
    h = jnp.dot(x_ref[...].astype(jnp.bfloat16), w1_ref[...],
                preferred_element_type=jnp.float32)
    h = jnp.maximum(h, 0.0) * m1_ref[...]
    y = jnp.dot(h.astype(jnp.bfloat16), w2_ref[...],
                preferred_element_type=jnp.float32)
    y = jnp.maximum(y, 0.0) * m2_ref[...]
    o_ref[...] = y.astype(o_ref.dtype)


def prepare_prenet_params(w1, w2):
    """torch Linear layout (out,in) -> (in,out) bf16 for the MXU."""
    return w1.T.astype(jnp.bfloat16), w2.T.astype(jnp.bfloat16)


def make_dropout_scales(key, n, d1, d2, p=0.5):
    k1, k2 = jax.random.split(key)
    s = 1.0 / (1.0 - p)
    m1 = jax.random.bernoulli(k1, 1.0 - p, (n, d1)).astype(jnp.float32) * s
    m2 = jax.random.bernoulli(k2, 1.0 - p, (n, d2)).astype(jnp.float32) * s
    return m1, m2


def prenet_forward(x, params, scales):
    w1t, w2t = params
    m1, m2 = scales
    n, din = x.shape
    d1 = w1t.shape[1]
    d2 = w2t.shape[1]
    return pl.pallas_call(
        _prenet_fused_kernel,
        out_shape=jax.ShapeDtypeStruct((n, d2), jnp.float32),
        grid=(1,),
        in_specs=[
            pl.BlockSpec((n, din), lambda i: (0, 0)),
            pl.BlockSpec((din, d1), lambda i: (0, 0)),
            pl.BlockSpec((d1, d2), lambda i: (0, 0)),
            pl.BlockSpec((n, d1), lambda i: (0, 0)),
            pl.BlockSpec((n, d2), lambda i: (0, 0)),
        ],
        out_specs=pl.BlockSpec((n, d2), lambda i: (0, 0)),
        compiler_params=pltpu.CompilerParams(
            dimension_semantics=("arbitrary",)),
    )(x, w1t, w2t, m1, m2)


# ----------------------------------------------------------------------------
# Kernel 2: full decode step, looped over the grid with VMEM-resident state
# ----------------------------------------------------------------------------
def _decode_step_kernel(
    # per-step inputs
    x_ref,          # (1, B, prenet_dim)  prenet output for step t
    do_attn_ref,    # (1, B, attn_rnn)    attention-rnn dropout scales
    do_dec_ref,     # (1, B, dec_rnn)     decoder-rnn dropout scales
    # resident inputs
    memory_ref,     # (B, T_in, enc_dim)
    wmem_ref,       # (enc_dim, attn_dim)          memory_layer.T
    mask_ref,       # (B, T_in)  1.0 where padded
    w_ai_x_ref,     # (prenet_dim, 4*attn_rnn)
    w_ai_c_ref,     # (enc_dim,    4*attn_rnn)
    w_ah_ref,       # (attn_rnn,   4*attn_rnn)
    b_a_ref,        # (1, 4*attn_rnn)
    wq_ref,         # (attn_rnn, attn_dim)
    w_loc_ref,      # (2, K, attn_dim)   fused location conv x dense
    v_ref,          # (1, attn_dim)
    w_di_h_ref,     # (attn_rnn, 4*dec_rnn)
    w_di_c_ref,     # (enc_dim,  4*dec_rnn)
    w_dh_ref,       # (dec_rnn,  4*dec_rnn)
    b_d_ref,        # (1, 4*dec_rnn)
    w_ph_ref,       # (dec_rnn, mel_dim)
    w_pc_ref,       # (enc_dim, mel_dim)
    b_p_ref,        # (1, mel_dim)
    w_gh_ref,       # (dec_rnn, 1)
    w_gc_ref,       # (enc_dim, 1)
    b_g_ref,        # (1, 1)
    # outputs
    mel_ref,        # (1, B, mel_dim)
    gate_ref,       # (1, B, 1)
    align_ref,      # (1, B, T_in)
    # VMEM scratch (persist across grid steps)
    att_h, att_c, dec_h, dec_c, att_w_pad, att_wc_pad, att_ctx, pmem,
):
    t = pl.program_id(0)
    B, T_in, enc_dim = memory_ref.shape
    attn_rnn = att_h.shape[1]
    dec_rnn = dec_h.shape[1]
    _, K, attn_dim = w_loc_ref.shape
    pad = (K - 1) // 2

    @pl.when(t == 0)
    def _init():
        att_h[...] = jnp.zeros_like(att_h)
        att_c[...] = jnp.zeros_like(att_c)
        dec_h[...] = jnp.zeros_like(dec_h)
        dec_c[...] = jnp.zeros_like(dec_c)
        att_w_pad[...] = jnp.zeros_like(att_w_pad)
        att_wc_pad[...] = jnp.zeros_like(att_wc_pad)
        att_ctx[...] = jnp.zeros_like(att_ctx)
        # processed_memory = memory @ memory_layer.T (computed once, kept in VMEM)
        for b in range(B):
            pmem[b] = jnp.dot(memory_ref[b], wmem_ref[...],
                              preferred_element_type=jnp.float32)

    # ---- attention LSTMCell on [prenet(x_t) ; attention_context] ----------
    x = x_ref[0]                                           # (B, prenet_dim)
    g = (jnp.dot(x, w_ai_x_ref[...], preferred_element_type=jnp.float32)
         + jnp.dot(att_ctx[...], w_ai_c_ref[...],
                   preferred_element_type=jnp.float32)
         + jnp.dot(att_h[...], w_ah_ref[...],
                   preferred_element_type=jnp.float32)
         + b_a_ref[...])
    i_g = jax.nn.sigmoid(g[:, :attn_rnn])
    f_g = jax.nn.sigmoid(g[:, attn_rnn:2 * attn_rnn])
    c_g = jnp.tanh(g[:, 2 * attn_rnn:3 * attn_rnn])
    o_g = jax.nn.sigmoid(g[:, 3 * attn_rnn:])
    ac_new = f_g * att_c[...] + i_g * c_g
    ah_new = o_g * jnp.tanh(ac_new)
    ah_new = ah_new * do_attn_ref[0]                       # attention dropout
    att_c[...] = ac_new
    att_h[...] = ah_new

    # ---- location-sensitive attention --------------------------------------
    pq = jnp.dot(ah_new, wq_ref[...], preferred_element_type=jnp.float32)
    acc = pq[:, None, :] + pmem[...]                       # (B, T_in, attn_dim)
    wl = w_loc_ref[...]                                    # (2, K, attn_dim)
    prev_w = att_w_pad[...]                                # (B, T_in + K - 1)
    prev_wc = att_wc_pad[...]
    for c, plane in ((0, prev_w), (1, prev_wc)):
        for k in range(K):
            sh = plane[:, k:k + T_in]                      # conv window slice
            acc = acc + sh[:, :, None] * wl[c:c + 1, k, :][None, :, :]

    e = jnp.sum(jnp.tanh(acc) * v_ref[...][None, :, :], axis=-1)   # (B, T_in)
    e = jnp.where(mask_ref[...] > 0.0, -1e30, e)
    e_max = jnp.max(e, axis=-1, keepdims=True)
    p = jnp.exp(e - e_max)
    w = p / jnp.sum(p, axis=-1, keepdims=True)             # attention weights

    ctx = jnp.sum(w[:, :, None] * memory_ref[...], axis=1)  # (B, enc_dim)

    att_w_pad[:, pad:pad + T_in] = w
    att_wc_pad[:, pad:pad + T_in] = att_wc_pad[:, pad:pad + T_in] + w
    att_ctx[...] = ctx

    # ---- decoder LSTMCell on [attention_hidden ; context] ------------------
    g2 = (jnp.dot(ah_new, w_di_h_ref[...], preferred_element_type=jnp.float32)
          + jnp.dot(ctx, w_di_c_ref[...], preferred_element_type=jnp.float32)
          + jnp.dot(dec_h[...], w_dh_ref[...],
                    preferred_element_type=jnp.float32)
          + b_d_ref[...])
    i2 = jax.nn.sigmoid(g2[:, :dec_rnn])
    f2 = jax.nn.sigmoid(g2[:, dec_rnn:2 * dec_rnn])
    c2 = jnp.tanh(g2[:, 2 * dec_rnn:3 * dec_rnn])
    o2 = jax.nn.sigmoid(g2[:, 3 * dec_rnn:])
    dc_new = f2 * dec_c[...] + i2 * c2
    dh_new = o2 * jnp.tanh(dc_new)
    dh_new = dh_new * do_dec_ref[0]                        # decoder dropout
    dec_c[...] = dc_new
    dec_h[...] = dh_new

    # ---- projection + gate on [decoder_hidden ; context] -------------------
    mel = (jnp.dot(dh_new, w_ph_ref[...], preferred_element_type=jnp.float32)
           + jnp.dot(ctx, w_pc_ref[...], preferred_element_type=jnp.float32)
           + b_p_ref[...])
    gate = (jnp.dot(dh_new, w_gh_ref[...], preferred_element_type=jnp.float32)
            + jnp.dot(ctx, w_gc_ref[...], preferred_element_type=jnp.float32)
            + b_g_ref[...])

    mel_ref[0] = mel
    gate_ref[0] = gate
    align_ref[0] = w


# ----------------------------------------------------------------------------
# Weight prep (one-time, outside the hot path)
# ----------------------------------------------------------------------------
def prep_decode_params(p, prenet_dim, enc_dim, attn_rnn, dec_rnn):
    w_ai = p["att_rnn_w_ih"]
    w_di = p["dec_rnn_w_ih"]
    w_loc = jnp.einsum("af,fck->cka", p["loc_dense_w"], p["loc_conv_w"])
    return dict(
        wmem=p["memory_w"].T,
        w_ai_x=w_ai[:, :prenet_dim].T,
        w_ai_c=w_ai[:, prenet_dim:].T,
        w_ah=p["att_rnn_w_hh"].T,
        b_a=(p["att_rnn_b_ih"] + p["att_rnn_b_hh"])[None, :],
        wq=p["query_w"].T,
        w_loc=w_loc,
        v=p["v_w"],
        w_di_h=w_di[:, :attn_rnn].T,
        w_di_c=w_di[:, attn_rnn:].T,
        w_dh=p["dec_rnn_w_hh"].T,
        b_d=(p["dec_rnn_b_ih"] + p["dec_rnn_b_hh"])[None, :],
        w_ph=p["proj_w"][:, :dec_rnn].T,
        w_pc=p["proj_w"][:, dec_rnn:].T,
        b_p=p["proj_b"][None, :],
        w_gh=p["gate_w"][:, :dec_rnn].T,
        w_gc=p["gate_w"][:, dec_rnn:].T,
        b_g=p["gate_b"][None, :],
    )


# ----------------------------------------------------------------------------
# Decoder.forward wrapper
# ----------------------------------------------------------------------------
def decoder_forward(memory, decoder_inputs_mel, memory_lengths, params, key, hp):
    B, T_in, enc_dim = memory.shape
    n_mel = hp["n_mel_channels"]
    n_frames = hp["n_frames_per_step"]
    mel_dim = n_mel * n_frames
    prenet_dim = hp["prenet_dim"]
    attn_rnn = hp["attention_rnn_dim"]
    dec_rnn = hp["decoder_rnn_dim"]

    # parse_decoder_inputs + go frame
    di = jnp.swapaxes(decoder_inputs_mel, 1, 2)            # (B, T_mel, n_mel)
    T_steps = di.shape[1] // n_frames
    di = di.reshape(B, T_steps, mel_dim)
    di = jnp.swapaxes(di, 0, 1)                            # (T, B, mel_dim)
    di = jnp.concatenate([jnp.zeros((1, B, mel_dim), jnp.float32), di], axis=0)

    # --- Prenet (fused Pallas kernel over all frames at once) ---
    k_pre, k_attn, k_dec = jax.random.split(key, 3)
    x2d = di.reshape((T_steps + 1) * B, mel_dim)
    w1t, w2t = prepare_prenet_params(params["prenet_w1"], params["prenet_w2"])
    m1, m2 = make_dropout_scales(k_pre, (T_steps + 1) * B,
                                 prenet_dim, prenet_dim, p=0.5)
    pre = prenet_forward(x2d, (w1t, w2t), (m1, m2))
    pre = pre.reshape(T_steps + 1, B, prenet_dim)
    x_steps = pre[:T_steps]                                # last frame unused

    # decode-step dropout scales (training mode)
    p_att, p_dec = hp["p_attention_dropout"], hp["p_decoder_dropout"]
    do_attn = (jax.random.bernoulli(k_attn, 1.0 - p_att, (T_steps, B, attn_rnn))
               .astype(jnp.float32) / (1.0 - p_att))
    do_dec = (jax.random.bernoulli(k_dec, 1.0 - p_dec, (T_steps, B, dec_rnn))
              .astype(jnp.float32) / (1.0 - p_dec))

    # ~get_mask_from_lengths -> 1.0 at padded positions
    mask_pad = (jnp.arange(T_in)[None, :] >=
                memory_lengths[:, None]).astype(jnp.float32)

    dp = prep_decode_params(params, prenet_dim, enc_dim, attn_rnn, dec_rnn)
    K = dp["w_loc"].shape[1]
    attn_dim = dp["wq"].shape[1]
    pad = (K - 1) // 2

    const2 = lambda t: (0, 0)
    const3 = lambda t: (0, 0, 0)
    step3 = lambda t: (t, 0, 0)

    mel_steps, gate_steps, align_steps = pl.pallas_call(
        _decode_step_kernel,
        out_shape=[
            jax.ShapeDtypeStruct((T_steps, B, mel_dim), jnp.float32),
            jax.ShapeDtypeStruct((T_steps, B, 1), jnp.float32),
            jax.ShapeDtypeStruct((T_steps, B, T_in), jnp.float32),
        ],
        grid=(T_steps,),
        in_specs=[
            pl.BlockSpec((1, B, prenet_dim), step3),
            pl.BlockSpec((1, B, attn_rnn), step3),
            pl.BlockSpec((1, B, dec_rnn), step3),
            pl.BlockSpec((B, T_in, enc_dim), const3),
            pl.BlockSpec((enc_dim, attn_dim), const2),
            pl.BlockSpec((B, T_in), const2),
            pl.BlockSpec((prenet_dim, 4 * attn_rnn), const2),
            pl.BlockSpec((enc_dim, 4 * attn_rnn), const2),
            pl.BlockSpec((attn_rnn, 4 * attn_rnn), const2),
            pl.BlockSpec((1, 4 * attn_rnn), const2),
            pl.BlockSpec((attn_rnn, attn_dim), const2),
            pl.BlockSpec((2, K, attn_dim), const3),
            pl.BlockSpec((1, attn_dim), const2),
            pl.BlockSpec((attn_rnn, 4 * dec_rnn), const2),
            pl.BlockSpec((enc_dim, 4 * dec_rnn), const2),
            pl.BlockSpec((dec_rnn, 4 * dec_rnn), const2),
            pl.BlockSpec((1, 4 * dec_rnn), const2),
            pl.BlockSpec((dec_rnn, mel_dim), const2),
            pl.BlockSpec((enc_dim, mel_dim), const2),
            pl.BlockSpec((1, mel_dim), const2),
            pl.BlockSpec((dec_rnn, 1), const2),
            pl.BlockSpec((enc_dim, 1), const2),
            pl.BlockSpec((1, 1), const2),
        ],
        out_specs=[
            pl.BlockSpec((1, B, mel_dim), step3),
            pl.BlockSpec((1, B, 1), step3),
            pl.BlockSpec((1, B, T_in), step3),
        ],
        scratch_shapes=[
            pltpu.VMEM((B, attn_rnn), jnp.float32),        # att_h
            pltpu.VMEM((B, attn_rnn), jnp.float32),        # att_c
            pltpu.VMEM((B, dec_rnn), jnp.float32),         # dec_h
            pltpu.VMEM((B, dec_rnn), jnp.float32),         # dec_c
            pltpu.VMEM((B, T_in + 2 * pad), jnp.float32),  # att weights (padded)
            pltpu.VMEM((B, T_in + 2 * pad), jnp.float32),  # cumulative (padded)
            pltpu.VMEM((B, enc_dim), jnp.float32),         # attention context
            pltpu.VMEM((B, T_in, attn_dim), jnp.float32),  # processed memory
        ],
        compiler_params=pltpu.CompilerParams(
            dimension_semantics=("arbitrary",)),
    )(x_steps, do_attn, do_dec, memory, dp["wmem"], mask_pad,
      dp["w_ai_x"], dp["w_ai_c"], dp["w_ah"], dp["b_a"],
      dp["wq"], dp["w_loc"], dp["v"],
      dp["w_di_h"], dp["w_di_c"], dp["w_dh"], dp["b_d"],
      dp["w_ph"], dp["w_pc"], dp["b_p"],
      dp["w_gh"], dp["w_gc"], dp["b_g"])

    # parse_decoder_outputs
    mel_outputs = jnp.swapaxes(mel_steps, 0, 1).reshape(
        B, T_steps * n_frames, n_mel)
    mel_outputs = jnp.swapaxes(mel_outputs, 1, 2)          # (B, n_mel, T_mel)
    gate_outputs = jnp.swapaxes(gate_steps[:, :, 0], 0, 1)  # (B, T)
    alignments = jnp.swapaxes(align_steps, 0, 1)           # (B, T, T_in)
    return mel_outputs, gate_outputs, alignments, (m1, m2, do_attn, do_dec)


# ----------------------------------------------------------------------------
# Pure-JAX reference (original weight layout, explicit conv / concat / softmax)
# ----------------------------------------------------------------------------
def reference_decoder(memory, decoder_inputs_mel, memory_lengths, p, drops, hp):
    m1, m2, do_attn, do_dec = drops
    B, T_in, enc_dim = memory.shape
    n_mel, n_frames = hp["n_mel_channels"], hp["n_frames_per_step"]
    mel_dim = n_mel * n_frames
    prenet_dim = hp["prenet_dim"]
    attn_rnn, dec_rnn = hp["attention_rnn_dim"], hp["decoder_rnn_dim"]
    K = p["loc_conv_w"].shape[2]
    pad = (K - 1) // 2

    di = jnp.swapaxes(decoder_inputs_mel, 1, 2)
    T_steps = di.shape[1] // n_frames
    di = jnp.swapaxes(di.reshape(B, T_steps, mel_dim), 0, 1)
    di = jnp.concatenate([jnp.zeros((1, B, mel_dim), jnp.float32), di], axis=0)

    # Prenet (same bf16-matmul / f32-accumulate math as the kernel)
    x2d = di.reshape((T_steps + 1) * B, mel_dim)
    w1t = p["prenet_w1"].T.astype(jnp.bfloat16)
    w2t = p["prenet_w2"].T.astype(jnp.bfloat16)
    h = jnp.maximum(jnp.dot(x2d.astype(jnp.bfloat16), w1t,
                            preferred_element_type=jnp.float32), 0.0) * m1
    y = jnp.maximum(jnp.dot(h.astype(jnp.bfloat16), w2t,
                            preferred_element_type=jnp.float32), 0.0) * m2
    pre = y.reshape(T_steps + 1, B, prenet_dim)

    mask_pad = (jnp.arange(T_in)[None, :] >=
                memory_lengths[:, None]).astype(jnp.float32)
    pm = jnp.einsum("bte,ae->bta", memory, p["memory_w"])

    def lstm(x, h, c, w_ih, w_hh, b_ih, b_hh, H):
        g = x @ w_ih.T + h @ w_hh.T + b_ih + b_hh
        i = jax.nn.sigmoid(g[:, :H])
        f = jax.nn.sigmoid(g[:, H:2 * H])
        gg = jnp.tanh(g[:, 2 * H:3 * H])
        o = jax.nn.sigmoid(g[:, 3 * H:])
        c = f * c + i * gg
        return o * jnp.tanh(c), c

    att_h = jnp.zeros((B, attn_rnn)); att_c = jnp.zeros((B, attn_rnn))
    dec_h = jnp.zeros((B, dec_rnn)); dec_c = jnp.zeros((B, dec_rnn))
    att_w = jnp.zeros((B, T_in)); att_wc = jnp.zeros((B, T_in))
    ctx = jnp.zeros((B, enc_dim))
    mels, gates, aligns = [], [], []

    for t in range(T_steps):
        x = pre[t]
        cell_in = jnp.concatenate([x, ctx], axis=1)
        att_h, att_c = lstm(cell_in, att_h, att_c, p["att_rnn_w_ih"],
                            p["att_rnn_w_hh"], p["att_rnn_b_ih"],
                            p["att_rnn_b_hh"], attn_rnn)
        att_h = att_h * do_attn[t]

        pq = att_h @ p["query_w"].T
        cat = jnp.stack([att_w, att_wc], axis=1)           # (B, 2, T_in)
        conv = jax.lax.conv_general_dilated(
            cat, p["loc_conv_w"], window_strides=(1,), padding=[(pad, pad)],
            dimension_numbers=("NCH", "OIH", "NCH"))
        loc = jnp.einsum("bft,af->bta", conv, p["loc_dense_w"])
        e = jnp.einsum("bta,a->bt",
                       jnp.tanh(pq[:, None, :] + loc + pm), p["v_w"][0])
        e = jnp.where(mask_pad > 0.0, -1e30, e)
        w = jax.nn.softmax(e, axis=1)
        ctx = jnp.einsum("bt,bte->be", w, memory)
        att_wc = att_wc + w
        att_w = w

        din = jnp.concatenate([att_h, ctx], axis=1)
        dec_h, dec_c = lstm(din, dec_h, dec_c, p["dec_rnn_w_ih"],
                            p["dec_rnn_w_hh"], p["dec_rnn_b_ih"],
                            p["dec_rnn_b_hh"], dec_rnn)
        dec_h = dec_h * do_dec[t]

        dhac = jnp.concatenate([dec_h, ctx], axis=1)
        mels.append(dhac @ p["proj_w"].T + p["proj_b"])
        gates.append(dhac @ p["gate_w"].T + p["gate_b"])
        aligns.append(w)

    mel = jnp.swapaxes(jnp.stack(mels), 0, 1).reshape(B, T_steps * n_frames, n_mel)
    mel = jnp.swapaxes(mel, 1, 2)
    gate = jnp.swapaxes(jnp.stack(gates)[:, :, 0], 0, 1)
    align = jnp.swapaxes(jnp.stack(aligns), 0, 1)
    return mel, gate, align


# ----------------------------------------------------------------------------
# Test harness
# ----------------------------------------------------------------------------
def _uni(key, shape, fan_in, fan_out):
    limit = (6.0 / (fan_in + fan_out)) ** 0.5
    return jax.random.uniform(key, shape, minval=-limit, maxval=limit,
                              dtype=jnp.float32)


if __name__ == "__main__":
    hp = dict(n_mel_channels=16, n_frames_per_step=2,
              encoder_embedding_dim=128, attention_rnn_dim=128,
              decoder_rnn_dim=128, prenet_dim=128, attention_dim=128,
              attention_location_n_filters=8, attention_location_kernel_size=3,
              p_attention_dropout=0.1, p_decoder_dropout=0.1)
    B, T_in, T_steps = 2, 16, 4
    enc, arn, drn, adim = 128, 128, 128, 128
    pdim = hp["prenet_dim"]
    n_mel, nf = hp["n_mel_channels"], hp["n_frames_per_step"]
    mel_dim = n_mel * nf
    nfilt, K = hp["attention_location_n_filters"], hp["attention_location_kernel_size"]
    T_mel = T_steps * nf

    root = jax.random.PRNGKey(0)
    ks = jax.random.split(root, 24)

    params = dict(
        prenet_w1=_uni(ks[0], (pdim, mel_dim), mel_dim, pdim),
        prenet_w2=_uni(ks[1], (pdim, pdim), pdim, pdim),
        att_rnn_w_ih=_uni(ks[2], (4 * arn, pdim + enc), pdim + enc, arn),
        att_rnn_w_hh=_uni(ks[3], (4 * arn, arn), arn, arn),
        att_rnn_b_ih=0.1 * jax.random.normal(ks[4], (4 * arn,), dtype=jnp.float32),
        att_rnn_b_hh=0.1 * jax.random.normal(ks[5], (4 * arn,), dtype=jnp.float32),
        query_w=_uni(ks[6], (adim, arn), arn, adim),
        memory_w=_uni(ks[7], (adim, enc), enc, adim),
        v_w=_uni(ks[8], (1, adim), adim, 1),
        loc_conv_w=_uni(ks[9], (nfilt, 2, K), 2 * K, nfilt * K),
        loc_dense_w=_uni(ks[10], (adim, nfilt), nfilt, adim),
        dec_rnn_w_ih=_uni(ks[11], (4 * drn, arn + enc), arn + enc, drn),
        dec_rnn_w_hh=_uni(ks[12], (4 * drn, drn), drn, drn),
        dec_rnn_b_ih=0.1 * jax.random.normal(ks[13], (4 * drn,), dtype=jnp.float32),
        dec_rnn_b_hh=0.1 * jax.random.normal(ks[14], (4 * drn,), dtype=jnp.float32),
        proj_w=_uni(ks[15], (mel_dim, drn + enc), drn + enc, mel_dim),
        proj_b=0.1 * jax.random.normal(ks[16], (mel_dim,), dtype=jnp.float32),
        gate_w=_uni(ks[17], (1, drn + enc), drn + enc, 1),
        gate_b=0.1 * jax.random.normal(ks[18], (1,), dtype=jnp.float32),
    )

    memory = jax.random.normal(ks[19], (B, T_in, enc), dtype=jnp.float32)
    decoder_inputs = jax.random.normal(ks[20], (B, n_mel, T_mel), dtype=jnp.float32)
    memory_lengths = jnp.array([16, 11], dtype=jnp.int32)
    drop_key = ks[21]

    mel, gate, align, drops = decoder_forward(
        memory, decoder_inputs, memory_lengths, params, drop_key, hp)
    mel, gate, align = jax.block_until_ready((mel, gate, align))

    mel_r, gate_r, align_r = reference_decoder(
        memory, decoder_inputs, memory_lengths, params, drops, hp)

    assert mel.shape == (B, n_mel, T_mel), mel.shape
    assert gate.shape == (B, T_steps), gate.shape
    assert align.shape == (B, T_steps, T_in), align.shape
    # attention weights are a valid distribution, padded positions ~ 0
    assert bool(jnp.allclose(jnp.sum(align, axis=-1), 1.0, atol=1e-3))
    assert bool(jnp.all(align[1, :, 11:] < 1e-6))
    # kernel pipeline matches the pure-JAX reference
    assert bool(jnp.allclose(mel, mel_r, rtol=5e-2, atol=5e-2)), \
        float(jnp.max(jnp.abs(mel - mel_r)))
    assert bool(jnp.allclose(gate, gate_r, rtol=5e-2, atol=5e-2)), \
        float(jnp.max(jnp.abs(gate - gate_r)))
    assert bool(jnp.allclose(align, align_r, atol=2e-2)), \
        float(jnp.max(jnp.abs(align - align_r)))

    print("KERNEL_OK")
</pallas_src>

<mosaic_0001>
module attributes {stable_mosaic.version = 11 : i64} {
  func.func @_prenet_fused_kernel(%arg0: i32, %arg1: memref<10x32xf32, #tpu.memory_space<vmem>>, %arg2: memref<32x128xbf16, #tpu.memory_space<vmem>>, %arg3: memref<128x128xbf16, #tpu.memory_space<vmem>>, %arg4: memref<10x128xf32, #tpu.memory_space<vmem>>, %arg5: memref<10x128xf32, #tpu.memory_space<vmem>>, %arg6: memref<10x128xf32, #tpu.memory_space<vmem>>) attributes {dimension_semantics = [#tpu.dimension_semantics<arbitrary>], iteration_bounds = array<i64: 1>, scalar_prefetch = 0 : i64, scratch_operands = 0 : i64, tpu.core_type = #tpu.core_type<tc>, window_params = [{pipeline_mode = #tpu.pipeline_mode<synchronous>, transform_indices = @transform_0, window_bounds = array<i64: 10, 32>}, {pipeline_mode = #tpu.pipeline_mode<synchronous>, transform_indices = @transform_1, window_bounds = array<i64: 32, 128>}, {pipeline_mode = #tpu.pipeline_mode<synchronous>, transform_indices = @transform_2, window_bounds = array<i64: 128, 128>}, {pipeline_mode = #tpu.pipeline_mode<synchronous>, transform_indices = @transform_3, window_bounds = array<i64: 10, 128>}, {pipeline_mode = #tpu.pipeline_mode<synchronous>, transform_indices = @transform_4, window_bounds = array<i64: 10, 128>}, {pipeline_mode = #tpu.pipeline_mode<synchronous>, transform_indices = @transform_5, window_bounds = array<i64: 10, 128>}]} {
    %c0 = arith.constant 0 : index
    %c0_0 = arith.constant 0 : index
    %0 = vector.load %arg1[%c0, %c0_0] : memref<10x32xf32, #tpu.memory_space<vmem>>, vector<10x32xf32>
    %1 = arith.truncf %0 : vector<10x32xf32> to vector<10x32xbf16>
    %c0_1 = arith.constant 0 : index
    %c0_2 = arith.constant 0 : index
    %2 = vector.load %arg2[%c0_1, %c0_2] : memref<32x128xbf16, #tpu.memory_space<vmem>>, vector<32x128xbf16>
    %cst = arith.constant dense<0.000000e+00> : vector<10x128xf32>
    %3 = tpu.matmul %1, %2, %cst {dimension_numbers = #tpu.dot_dimension_numbers<[1], [0], [0], [1], [0, 0, 1, 1], [], []>} : vector<10x32xbf16>, vector<32x128xbf16>, vector<10x128xf32> -> vector<10x128xf32>
    %cst_3 = arith.constant 0.000000e+00 : f32
    %4 = vector.broadcast %cst_3 : f32 to vector<10x128xf32>
    %5 = arith.maximumf %3, %4 : vector<10x128xf32>
    %c0_4 = arith.constant 0 : index
    %c0_5 = arith.constant 0 : index
    %6 = vector.load %arg4[%c0_4, %c0_5] : memref<10x128xf32, #tpu.memory_space<vmem>>, vector<10x128xf32>
    %7 = arith.mulf %5, %6 : vector<10x128xf32>
    %8 = arith.truncf %7 : vector<10x128xf32> to vector<10x128xbf16>
    %c0_6 = arith.constant 0 : index
    %c0_7 = arith.constant 0 : index
    %9 = vector.load %arg3[%c0_6, %c0_7] : memref<128x128xbf16, #tpu.memory_space<vmem>>, vector<128x128xbf16>
    %cst_8 = arith.constant dense<0.000000e+00> : vector<10x128xf32>
    %10 = tpu.matmul %8, %9, %cst_8 {dimension_numbers = #tpu.dot_dimension_numbers<[1], [0], [0], [1], [0, 0, 1, 1], [], []>} : vector<10x128xbf16>, vector<128x128xbf16>, vector<10x128xf32> -> vector<10x128xf32>
    %cst_9 = arith.constant 0.000000e+00 : f32
    %11 = vector.broadcast %cst_9 : f32 to vector<10x128xf32>
    %12 = arith.maximumf %10, %11 : vector<10x128xf32>
    %c0_10 = arith.constant 0 : index
    %c0_11 = arith.constant 0 : index
    %13 = vector.load %arg5[%c0_10, %c0_11] : memref<10x128xf32, #tpu.memory_space<vmem>>, vector<10x128xf32>
    %14 = arith.mulf %12, %13 : vector<10x128xf32>
    %c0_12 = arith.constant 0 : index
    %c0_13 = arith.constant 0 : index
    %15 = vector.load %arg6[%c0_12, %c0_13] : memref<10x128xf32, #tpu.memory_space<vmem>>, vector<10x128xf32>
    tpu.vector_store %arg6[%c0_12, %c0_13], %14 {strides = array<i32>} : memref<10x128xf32, #tpu.memory_space<vmem>>, vector<10x128xf32>,
    return
  }
  func.func @transform_0(%arg0: i32) -> (i32, i32) {
    %c0_i32 = arith.constant 0 : i32
    %c0_i32_0 = arith.constant 0 : i32
    %c0_i32_1 = arith.constant 0 : i32
    return %c0_i32, %c0_i32_0 : i32, i32
  }
  func.func @transform_1(%arg0: i32) -> (i32, i32) {
    %c0_i32 = arith.constant 0 : i32
    %c0_i32_0 = arith.constant 0 : i32
    %c0_i32_1 = arith.constant 0 : i32
    return %c0_i32, %c0_i32_0 : i32, i32
  }
  func.func @transform_2(%arg0: i32) -> (i32, i32) {
    %c0_i32 = arith.constant 0 : i32
    %c0_i32_0 = arith.constant 0 : i32
    %c0_i32_1 = arith.constant 0 : i32
    return %c0_i32, %c0_i32_0 : i32, i32
  }
  func.func @transform_3(%arg0: i32) -> (i32, i32) {
    %c0_i32 = arith.constant 0 : i32
    %c0_i32_0 = arith.constant 0 : i32
    %c0_i32_1 = arith.constant 0 : i32
    return %c0_i32, %c0_i32_0 : i32, i32
  }
  func.func @transform_4(%arg0: i32) -> (i32, i32) {
    %c0_i32 = arith.constant 0 : i32
    %c0_i32_0 = arith.constant 0 : i32
    %c0_i32_1 = arith.constant 0 : i32
    return %c0_i32, %c0_i32_0 : i32, i32
  }
  func.func @transform_5(%arg0: i32) -> (i32, i32) {
    %c0_i32 = arith.constant 0 : i32
    %c0_i32_0 = arith.constant 0 : i32
    %c0_i32_1 = arith.constant 0 : i32
    return %c0_i32, %c0_i32_0 : i32, i32
  }
}

</mosaic_0001>

<llo_original>
// kernel: tpu_custom_call.1
$region0: #{tpu_custom_call.1}
  #allocation0 [shape = 'u32[]', space=smem, size = 0x4, offset = 0x4, fixed_abs, tag = 'smem constant byte address 0x4 - core index']
  #allocation1 [shape = 'u32[72,128]{1,0:T(1,128)}', space=vmem, size = 0x9000, scoped, tag = 'internal scratch']
  %s0 = inlined_call_operand.hbm [shape: f32[10,32], index: 0, kind: input, shape index: {}]
  %s1 = inlined_call_operand.hbm [shape: bf16[32,128], index: 1, kind: input, shape index: {}]
  %s2 = inlined_call_operand.hbm [shape: bf16[128,128], index: 2, kind: input, shape index: {}]
  %s3 = inlined_call_operand.hbm [shape: f32[10,128], index: 3, kind: input, shape index: {}]
  %s4 = inlined_call_operand.hbm [shape: f32[10,128], index: 4, kind: input, shape index: {}]
  %s5 = inlined_call_operand.hbm [shape: f32[10,128], index: 5, kind: output, shape index: {}]
  %s6 = sld [smem:[#allocation0]]
  $region50: #{tpu_custom_call.1} parent=0
    _
  %s8 = ssub.s32 1, %s6
  %s9 = scalar_select 0, %s8, %s6
  $region1: #{tpu_custom_call.1} parent=0
    #allocation2 [shape = 'u8[8192]{0}', space=vmem, size = 0x2000, scoped, tag = 'input window, operand 0, single buffered']
    #allocation3 [shape = 's32[1]{0}', space=sflag, size = 0x4, scoped, tag = 'scoped memory for tpu_custom_call.1']
    #allocation4 [shape = 's32[1]{0}', space=sflag, size = 0x4, scoped, tag = 'scoped memory for tpu_custom_call.1']
    #allocation5 [shape = 'u8[8192]{0}', space=vmem, size = 0x2000, scoped, tag = 'input window, operand 1, single buffered']
    #allocation6 [shape = 's32[1]{0}', space=sflag, size = 0x4, scoped, tag = 'scoped memory for tpu_custom_call.1']
    #allocation7 [shape = 'u8[32768]{0}', space=vmem, size = 0x8000, scoped, tag = 'input window, operand 2, single buffered']
    #allocation8 [shape = 'u8[8192]{0}', space=vmem, size = 0x2000, scoped, tag = 'input window, operand 3, single buffered']
    #allocation9 [shape = 's32[1]{0}', space=sflag, size = 0x4, scoped, tag = 'scoped memory for tpu_custom_call.1']
    #allocation10 [shape = 'u8[8192]{0}', space=vmem, size = 0x2000, scoped, tag = 'input window, operand 4, single buffered']
    #allocation11 [shape = 'u8[8192]{0}', space=vmem, size = 0x2000, scoped, tag = 'output window, operand 0, single buffered']
    %10 = vsyncpa [#allocation3], 0
    %11 = vsyncpa [#allocation6], 0
    %12 = vsyncpa [#allocation9], 0
    %13 = vsyncpa [#allocation4], 0
    // Predicated region
    $region2: #{tpu_custom_call.1} parent=1 // pred_check
      _
    $region3: #{tpu_custom_call.1} parent=1 // pred_check_branch
      %15 = sbr.rel (0) target = $region5
    $region4: #{tpu_custom_call.1} parent=1 // pred_region
      %17 = vsyncadd [#allocation3], 0
      %s18 = sshll.u32 %s0, 4
      %s19 = int_to_ptr.hbm [resolvable:$true] %s18
      %s20 = sshll.u32 [#allocation2], 4
      %s21 = int_to_ptr.vmem [resolvable:$true] %s20
      %26 = dma.hbm_to_vmem [thread:$0]  %s19, 256, %s21, [#allocation3], 128, 128, 8
    $region5: #{tpu_custom_call.1} parent=1 // pred_fallthru
      _
    // Predicated region
    $region6: #{tpu_custom_call.1} parent=1 // pred_check
      _
    $region7: #{tpu_custom_call.1} parent=1 // pred_check_branch
      %28 = sbr.rel (0) target = $region9
    $region8: #{tpu_custom_call.1} parent=1 // pred_region
      %30 = vsyncadd [#allocation6], 0
      %s31 = sshll.u32 %s1, 4
      %s32 = int_to_ptr.hbm [resolvable:$true] %s31
      %s33 = sshll.u32 [#allocation5], 4
      %s34 = int_to_ptr.vmem [resolvable:$true] %s33
      %39 = dma.hbm_to_vmem [thread:$0]  %s32, 256, %s34, [#allocation6], 64, 64, 4
    $region9: #{tpu_custom_call.1} parent=1 // pred_fallthru
      _
    // Predicated region
    $region10: #{tpu_custom_call.1} parent=1 // pred_check
      _
    $region11: #{tpu_custom_call.1} parent=1 // pred_check_branch
      %41 = sbr.rel (0) target = $region13
    $region12: #{tpu_custom_call.1} parent=1 // pred_region
      %43 = vsyncadd [#allocation6], 0
      %s44 = sshll.u32 %s2, 4
      %s45 = int_to_ptr.hbm [resolvable:$true] %s44
      %s46 = sshll.u32 [#allocation7], 4
      %s47 = int_to_ptr.vmem [resolvable:$true] %s46
      %52 = dma.hbm_to_vmem [thread:$0]  %s45, 1024, %s47, [#allocation6], 64, 64, 4
    $region13: #{tpu_custom_call.1} parent=1 // pred_fallthru
      _
    // Predicated region
    $region14: #{tpu_custom_call.1} parent=1 // pred_check
      _
    $region15: #{tpu_custom_call.1} parent=1 // pred_check_branch
      %54 = sbr.rel (0) target = $region17
    $region16: #{tpu_custom_call.1} parent=1 // pred_region
      %56 = vsyncadd [#allocation9], 0
      %s57 = sshll.u32 %s3, 4
      %s58 = int_to_ptr.hbm [resolvable:$true] %s57
      %s59 = sshll.u32 [#allocation8], 4
      %s60 = int_to_ptr.vmem [resolvable:$true] %s59
      %65 = dma.hbm_to_vmem [thread:$0]  %s58, 256, %s60, [#allocation9], 128, 128, 8
    $region17: #{tpu_custom_call.1} parent=1 // pred_fallthru
      _
    // Predicated region
    $region18: #{tpu_custom_call.1} parent=1 // pred_check
      _
    $region19: #{tpu_custom_call.1} parent=1 // pred_check_branch
      %67 = sbr.rel (0) target = $region21
    $region20: #{tpu_custom_call.1} parent=1 // pred_region
      %69 = vsyncadd [#allocation9], 0
      %s70 = sshll.u32 %s4, 4
      %s71 = int_to_ptr.hbm [resolvable:$true] %s70
      %s72 = sshll.u32 [#allocation10], 4
      %s73 = int_to_ptr.vmem [resolvable:$true] %s72
      %78 = dma.hbm_to_vmem [thread:$0]  %s71, 256, %s73, [#allocation9], 128, 128, 8
    $region21: #{tpu_custom_call.1} parent=1 // pred_fallthru
      _
    // Predicated region
    $region22: #{tpu_custom_call.1} parent=1 // pred_check
      _
    $region23: #{tpu_custom_call.1} parent=1 // pred_check_branch
      %80 = sbr.rel (0) target = $region25
    $region24: #{tpu_custom_call.1} parent=1 // pred_region
      %82 = dma.done [#allocation3], 256
    $region25: #{tpu_custom_call.1} parent=1 // pred_fallthru
      _
    // Predicated region
    $region26: #{tpu_custom_call.1} parent=1 // pred_check
      _
    $region27: #{tpu_custom_call.1} parent=1 // pred_check_branch
      %84 = sbr.rel (0) target = $region29
    $region28: #{tpu_custom_call.1} parent=1 // pred_region
      %86 = dma.done [#allocation6], 256
    $region29: #{tpu_custom_call.1} parent=1 // pred_fallthru
      _
    // Predicated region
    $region30: #{tpu_custom_call.1} parent=1 // pred_check
      _
    $region31: #{tpu_custom_call.1} parent=1 // pred_check_branch
      %88 = sbr.rel (0) target = $region33
    $region32: #{tpu_custom_call.1} parent=1 // pred_region
      %90 = dma.done [#allocation6], 1024
    $region33: #{tpu_custom_call.1} parent=1 // pred_fallthru
      _
    // Predicated region
    $region34: #{tpu_custom_call.1} parent=1 // pred_check
      _
    $region35: #{tpu_custom_call.1} parent=1 // pred_check_branch
      %92 = sbr.rel (0) target = $region37
    $region36: #{tpu_custom_call.1} parent=1 // pred_region
      %94 = dma.done [#allocation9], 256
    $region37: #{tpu_custom_call.1} parent=1 // pred_fallthru
      _
    // Predicated region
    $region38: #{tpu_custom_call.1} parent=1 // pred_check
      _
    $region39: #{tpu_custom_call.1} parent=1 // pred_check_branch
      %96 = sbr.rel (0) target = $region41
    $region40: #{tpu_custom_call.1} parent=1 // pred_region
      %98 = dma.done [#allocation9], 256
    $region41: #{tpu_custom_call.1} parent=1 // pred_fallthru
      _
    %v100 = vld [vmem:[#allocation2] sm:$0xff]
    %v101 = vld [vmem:[#allocation2 + $0x8] sm:$0x3]
    %v102 = vpack.c.bf16 %v101, %v100
    %v103 = vld [vmem:[#allocation5] sm:$0xf]
    %v104 = vld [vmem:[#allocation5 + $0x4] sm:$0xf]
    %v105 = vld [vmem:[#allocation5 + $0x8] sm:$0xf]
    %v106 = vld [vmem:[#allocation5 + $0xc] sm:$0xf]
    %v111 = vunpack.c.l.b16 %v103
    %v112 = vunpack.c.l.b16 %v104
    %v113 = vunpack.c.l.b16 %v105
    %v114 = vunpack.c.l.b16 %v106
    %v115 = vpack.c.b16 %v112, %v111
    %v116 = vpack.c.b16 %v114, %v113
    %vm119 = vcmask 261120
    %v121 = vsel %vm119, %v102, 0
    %123 = vmatpush.bf16.msra.mxu0 0
    %124 = vmatpush.bf16.msra.mxu0 0
    %125 = vmatpush.bf16.msra.mxu0 0
    %126 = vmatpush.bf16.msra.mxu0 0
    %127 = vmatpush.bf16.msra.mxu0 0
    %128 = vmatpush.bf16.msra.mxu0 0
    %129 = vmatpush.bf16.msra.mxu0 %v116
    %130 = vmatpush.bf16.msra.mxu0 %v115
    %131 = vmatmul.bf16.gmra.mxu0 %v121
    %v132 = vpop.f32.mrf.mxu0
    %v133 = vadd.f32 0.0, %v132
    %v134 = vpop.f32.mrf.mxu0
    %v135 = vadd.f32 0.0, %v134
    %136 = vdwg.mxu0
    %v137 = vmax.f32 %v133, 0.0
    %v138 = vmax.f32 %v135, 0.0
    %v139 = vld [vmem:[#allocation8] sm:$0xff]
    %v140 = vld [vmem:[#allocation8 + $0x8] sm:$0x3]
    %v141 = vmul.f32 %v137, %v139
    %v142 = vmul.f32 %v138, %v140
    %v143 = vpack.c.bf16 %v142, %v141
    %v144 = vld [vmem:[#allocation7] sm:$0xf]
    %v145 = vld [vmem:[#allocation7 + $0x4] sm:$0xf]
    %v146 = vld [vmem:[#allocation7 + $0x8] sm:$0xf]
    %v147 = vld [vmem:[#allocation7 + $0xc] sm:$0xf]
    %v148 = vld [vmem:[#allocation7 + $0x10] sm:$0xf]
    %v149 = vld [vmem:[#allocation7 + $0x14] sm:$0xf]
    %v150 = vld [vmem:[#allocation7 + $0x18] sm:$0xf]
    %v151 = vld [vmem:[#allocation7 + $0x1c] sm:$0xf]
    %v152 = vld [vmem:[#allocation7 + $0x20] sm:$0xf]
    %v153 = vld [vmem:[#allocation7 + $0x24] sm:$0xf]
    %v154 = vld [vmem:[#allocation7 + $0x28] sm:$0xf]
    %v155 = vld [vmem:[#allocation7 + $0x2c] sm:$0xf]
    %v156 = vld [vmem:[#allocation7 + $0x30] sm:$0xf]
    %v157 = vld [vmem:[#allocation7 + $0x34] sm:$0xf]
    %v158 = vld [vmem:[#allocation7 + $0x38] sm:$0xf]
    %v159 = vld [vmem:[#allocation7 + $0x3c] sm:$0xf]
    %v176 = vunpack.c.l.b16 %v144
    %v177 = vunpack.c.l.b16 %v145
    %v178 = vunpack.c.l.b16 %v146
    %v179 = vunpack.c.l.b16 %v147
    %v180 = vunpack.c.l.b16 %v148
    %v181 = vunpack.c.l.b16 %v149
    %v182 = vunpack.c.l.b16 %v150
    %v183 = vunpack.c.l.b16 %v151
    %v184 = vunpack.c.l.b16 %v152
    %v185 = vunpack.c.l.b16 %v153
    %v186 = vunpack.c.l.b16 %v154
    %v187 = vunpack.c.l.b16 %v155
    %v188 = vunpack.c.l.b16 %v156
    %v189 = vunpack.c.l.b16 %v157
    %v190 = vunpack.c.l.b16 %v158
    %v191 = vunpack.c.l.b16 %v159
    %v192 = vpack.c.b16 %v177, %v176
    %v193 = vpack.c.b16 %v179, %v178
    %v194 = vpack.c.b16 %v181, %v180
    %v195 = vpack.c.b16 %v183, %v182
    %v196 = vpack.c.b16 %v185, %v184
    %v197 = vpack.c.b16 %v187, %v186
    %v198 = vpack.c.b16 %v189, %v188
    %v199 = vpack.c.b16 %v191, %v190
    %208 = vmatpush.bf16.msra.mxu0 %v199
    %209 = vmatpush.bf16.msra.mxu0 %v198
    %210 = vmatpush.bf16.msra.mxu0 %v197
    %211 = vmatpush.bf16.msra.mxu0 %v196
    %212 = vmatpush.bf16.msra.mxu0 %v195
    %213 = vmatpush.bf16.msra.mxu0 %v194
    %214 = vmatpush.bf16.msra.mxu0 %v193
    %215 = vmatpush.bf16.msra.mxu0 %v192
    %216 = vmatmul.bf16.gmra.mxu0 %v143
    %v217 = vpop.f32.mrf.mxu0
    %v218 = vadd.f32 0.0, %v217
    %v219 = vpop.f32.mrf.mxu0
    %v220 = vadd.f32 0.0, %v219
    %221 = vdwg.mxu0
    %v222 = vmax.f32 %v218, 0.0
    %v223 = vmax.f32 %v220, 0.0
    %v224 = vld [vmem:[#allocation10] sm:$0xff]
    %v225 = vld [vmem:[#allocation10 + $0x8] sm:$0x3]
    %v226 = vmul.f32 %v222, %v224
    %v227 = vmul.f32 %v223, %v225
    %228 = vst [vmem:[#allocation11] sm:$0xff] %v226
    %229 = vst [vmem:[#allocation11 + $0x8] sm:$0x3] %v227
    // Predicated region
    $region42: #{tpu_custom_call.1} parent=1 // pred_check
      _
    $region43: #{tpu_custom_call.1} parent=1 // pred_check_branch
      %231 = sbr.rel (0) target = $region45
    $region44: #{tpu_custom_call.1} parent=1 // pred_region
      %233 = vsyncadd [#allocation4], 0
      %s234 = sshll.u32 [#allocation11], 4
      %s235 = int_to_ptr.vmem [resolvable:$true] %s234
      %s236 = sshll.u32 %s5, 4
      %s237 = int_to_ptr.hbm [resolvable:$true] %s236
      %242 = dma.vmem_to_hbm [thread:$0]  %s235, 256, %s237, [#allocation4], 128, 128, 8
    $region45: #{tpu_custom_call.1} parent=1 // pred_fallthru
      _
    // Predicated region
    $region46: #{tpu_custom_call.1} parent=1 // pred_check
      _
    $region47: #{tpu_custom_call.1} parent=1 // pred_check_branch
      %244 = sbr.rel (0) target = $region49
    $region48: #{tpu_custom_call.1} parent=1 // pred_region
      %246 = dma.done [#allocation4], 256
    $region49: #{tpu_custom_call.1} parent=1 // pred_fallthru
      _
    %247 = vsyncpa [#allocation3], 1
    %248 = vsyncpa [#allocation6], 1
    %249 = vsyncpa [#allocation9], 1
    %250 = vsyncpa [#allocation4], 1

</llo_original>
